<compile_context>
chip_gen: v7x
topology: tpu7x:2x2x1
jax: 0.10.0
libtpu: 0.0.40
codegen_flags: <defaults>
</compile_context>

<pallas_src>
import functools

import jax
import jax.numpy as jnp
from jax.experimental import pallas as pl
from jax.experimental.pallas import tpu as pltpu


# ---------------------------------------------------------------------------
# Kernels (pe generated in-kernel; no pe table in HBM/VMEM)
# ---------------------------------------------------------------------------

def _pe_kernel_rows(x_ref, o_ref):
    """Block = (1, TS, D): sublanes are sequence positions, lanes are d_model."""
    _, ts, _ = x_ref.shape
    pos = pl.program_id(1) * ts + jax.lax.broadcasted_iota(jnp.int32, x_ref.shape, 1)
    col = jax.lax.broadcasted_iota(jnp.int32, x_ref.shape, 2)
    pe = jnp.where((col & 1) == 0, pos.astype(o_ref.dtype), 0.0)
    o_ref[...] = x_ref[...] * 0.5 + pe


def _pe_kernel_folded(x_ref, o_ref, *, d_log2):
    """Block = (1, TR, LW) of a lane-dense fold of one sequence (S*D elems).

    For flat offset n within one sequence: pos = n >> log2(D), column parity
    = n & 1 (valid because LW % D == 0 and D is an even power of two).
    """
    _, tr, lw = x_ref.shape
    row = jax.lax.broadcasted_iota(jnp.int32, x_ref.shape, 1)
    lane = jax.lax.broadcasted_iota(jnp.int32, x_ref.shape, 2)
    off = (pl.program_id(1) * tr + row) * lw + lane
    pos = (off >> d_log2).astype(o_ref.dtype)
    pe = jnp.where((off & 1) == 0, pos, 0.0)
    o_ref[...] = x_ref[...] * 0.5 + pe


# ---------------------------------------------------------------------------
# Wrapper
# ---------------------------------------------------------------------------

_TARGET_TILE_ELEMS = 512 * 1024  # ~2 MiB of f32 per tile; sweepable per chip gen.


def _compiler_params():
    return pltpu.CompilerParams(
        dimension_semantics=("parallel", "parallel"),
        vmem_limit_bytes=32 * 1024 * 1024,
    )


def positional_encoder(x: jnp.ndarray, max_seq_len: int = 80) -> jnp.ndarray:
    """x: [B, S, D] float32 -> x * 0.5 + pe[:S]  (pe generated in-kernel)."""
    B, S, D = x.shape
    if S > max_seq_len:
        raise ValueError(f"seq_len {S} exceeds max_seq_len {max_seq_len}")

    # Lane-dense fold when d_model is a small power of two (< 128).
    fold = (D < 128) and (D & (D - 1) == 0) and ((S * D) % 128 == 0)

    if fold:
        sd = S * D
        lw = 128
        while lw * 2 <= min(sd, 2048) and sd % (lw * 2) == 0:
            lw *= 2                               # widest clean lane fold
        rows = sd // lw
        if rows <= 8:
            tr = rows                             # full dim -> always legal
        else:
            tr = min(rows, max(8, (_TARGET_TILE_ELEMS // lw) // 8 * 8))
        grid = (B, pl.cdiv(rows, tr))
        block = (1, tr, lw)
        xv = x.reshape(B, rows, lw)
        out = pl.pallas_call(
            functools.partial(_pe_kernel_folded, d_log2=D.bit_length() - 1),
            out_shape=jax.ShapeDtypeStruct((B, rows, lw), x.dtype),
            grid_spec=pltpu.PrefetchScalarGridSpec(
                num_scalar_prefetch=0,
                grid=grid,
                in_specs=[pl.BlockSpec(block, lambda b, t: (b, t, 0))],
                out_specs=pl.BlockSpec(block, lambda b, t: (b, t, 0)),
            ),
            input_output_aliases={0: 0},
            compiler_params=_compiler_params(),
        )(xv)
        return out.reshape(B, S, D)

    # General path: tile sequence rows; lane dim = full d_model.
    if S <= 8:
        ts = S                                    # full dim -> always legal
    else:
        ts = min(S, max(8, (_TARGET_TILE_ELEMS // max(D, 1)) // 8 * 8))
    grid = (B, pl.cdiv(S, ts))
    block = (1, ts, D)
    return pl.pallas_call(
        _pe_kernel_rows,
        out_shape=jax.ShapeDtypeStruct((B, S, D), x.dtype),
        grid_spec=pltpu.PrefetchScalarGridSpec(
            num_scalar_prefetch=0,
            grid=grid,
            in_specs=[pl.BlockSpec(block, lambda b, t: (b, t, 0))],
            out_specs=pl.BlockSpec(block, lambda b, t: (b, t, 0)),
        ),
        input_output_aliases={0: 0},
        compiler_params=_compiler_params(),
    )(x)


def _pe_reference(x: jnp.ndarray) -> jnp.ndarray:
    """Plain-JAX reference with identical semantics (also the tiny-input path)."""
    _, S, D = x.shape
    pos = jnp.arange(S, dtype=x.dtype)[:, None]
    col = jnp.arange(D, dtype=jnp.int32)[None, :]
    pe = jnp.where(col % 2 == 0, pos, 0.0)
    return x * 0.5 + pe[None]


def positional_encoder_auto(x, max_seq_len=80, *, min_pallas_elements=64 * 1024):
    """Below ~256 KiB the pallas_call launch cost dominates: let XLA fuse it."""
    if x.size < min_pallas_elements:
        return _pe_reference(x)
    return positional_encoder(x, max_seq_len)


if __name__ == "__main__":
    key = jax.random.PRNGKey(0)
    k1, k2 = jax.random.split(key)

    # Small demo shape (d_model=32 -> lane-dense folded kernel path).
    B, S, D = 2, 8, 32
    x = jax.random.normal(k1, (B, S, D), dtype=jnp.float32)
    ref = _pe_reference(x)
    out = jax.block_until_ready(positional_encoder(x))
    assert out.shape == (B, S, D)
    assert jnp.allclose(out, ref, atol=1e-6), "folded path mismatch"

    # Also exercise the general row-tiled path (d_model multiple of 128).
    B2, S2, D2 = 2, 16, 128
    x2 = jax.random.normal(k2, (B2, S2, D2), dtype=jnp.float32)
    ref2 = _pe_reference(x2)
    out2 = jax.block_until_ready(positional_encoder(x2))
    assert jnp.allclose(out2, ref2, atol=1e-6), "rows path mismatch"

    print("KERNEL_OK")
</pallas_src>

<mosaic_0001>
module attributes {stable_mosaic.version = 11 : i64} {
  func.func @_pe_kernel_folded(%arg0: i32, %arg1: i32, %arg2: memref<1x1x256xf32, #tpu.memory_space<vmem>>, %arg3: memref<1x1x256xf32, #tpu.memory_space<vmem>>) attributes {dimension_semantics = [#tpu.dimension_semantics<parallel>, #tpu.dimension_semantics<parallel>], iteration_bounds = array<i64: 2, 1>, scalar_prefetch = 0 : i64, scratch_operands = 0 : i64, tpu.core_type = #tpu.core_type<tc>, window_params = [{transform_indices = @transform_0, window_bounds = array<i64: 1, 1, 256>}, {transform_indices = @transform_1, window_bounds = array<i64: 1, 1, 256>}]} {
    %0 = tpu.iota {dimensions = array<i32: 1>} : vector<1x1x256xi32>
    %1 = tpu.iota {dimensions = array<i32: 2>} : vector<1x1x256xi32>
    %c1_i32 = arith.constant 1 : i32
    %2 = arith.muli %arg1, %c1_i32 : i32
    %3 = vector.broadcast %2 : i32 to vector<1x1x256xi32>
    %4 = arith.addi %3, %0 : vector<1x1x256xi32>
    %c256_i32 = arith.constant 256 : i32
    %5 = vector.broadcast %c256_i32 : i32 to vector<1x1x256xi32>
    %6 = arith.muli %4, %5 : vector<1x1x256xi32>
    %7 = arith.addi %6, %1 : vector<1x1x256xi32>
    %c5_i32 = arith.constant 5 : i32
    %8 = vector.broadcast %c5_i32 : i32 to vector<1x1x256xi32>
    %9 = arith.shrsi %7, %8 : vector<1x1x256xi32>
    %10 = arith.sitofp %9 : vector<1x1x256xi32> to vector<1x1x256xf32>
    %c1_i32_0 = arith.constant 1 : i32
    %11 = vector.broadcast %c1_i32_0 : i32 to vector<1x1x256xi32>
    %12 = arith.andi %7, %11 : vector<1x1x256xi32>
    %c0_i32 = arith.constant 0 : i32
    %13 = vector.broadcast %c0_i32 : i32 to vector<1x1x256xi32>
    %14 = arith.cmpi eq, %12, %13 : vector<1x1x256xi32>
    %cst = arith.constant 0.000000e+00 : f32
    %15 = vector.broadcast %cst : f32 to vector<1x1x256xf32>
    %16 = arith.select %14, %10, %15 : vector<1x1x256xi1>, vector<1x1x256xf32>
    %c0 = arith.constant 0 : index
    %c0_1 = arith.constant 0 : index
    %c0_2 = arith.constant 0 : index
    %17 = vector.load %arg2[%c0, %c0_1, %c0_2] : memref<1x1x256xf32, #tpu.memory_space<vmem>>, vector<1x1x256xf32>
    %cst_3 = arith.constant 5.000000e-01 : f32
    %18 = vector.broadcast %cst_3 : f32 to vector<1x1x256xf32>
    %19 = arith.mulf %17, %18 : vector<1x1x256xf32>
    %20 = arith.addf %19, %16 : vector<1x1x256xf32>
    %c0_4 = arith.constant 0 : index
    %c0_5 = arith.constant 0 : index
    %c0_6 = arith.constant 0 : index
    %21 = vector.load %arg3[%c0_4, %c0_5, %c0_6] : memref<1x1x256xf32, #tpu.memory_space<vmem>>, vector<1x1x256xf32>
    tpu.vector_store %arg3[%c0_4, %c0_5, %c0_6], %20 {strides = array<i32>} : memref<1x1x256xf32, #tpu.memory_space<vmem>>, vector<1x1x256xf32>,
    return
  }
  func.func @transform_0(%arg0: i32, %arg1: i32) -> (i32, i32, i32) {
    %c0_i32 = arith.constant 0 : i32
    %c0_i32_0 = arith.constant 0 : i32
    return %arg0, %arg1, %c0_i32 : i32, i32, i32
  }
  func.func @transform_1(%arg0: i32, %arg1: i32) -> (i32, i32, i32) {
    %c0_i32 = arith.constant 0 : i32
    %c0_i32_0 = arith.constant 0 : i32
    return %arg0, %arg1, %c0_i32 : i32, i32, i32
  }
}

</mosaic_0001>

<llo_original>
// kernel: tpu_custom_call.1
$region0: #{tpu_custom_call.1}
  #allocation0 [shape = 'u32[]', space=smem, size = 0x4, offset = 0x4, fixed_abs, tag = 'smem constant byte address 0x4 - core index']
  #allocation1 [shape = 'u32[144,128]{1,0:T(1,128)}', space=vmem, size = 0x12000, scoped, tag = 'internal scratch']
  %s0 = inlined_call_operand.hbm [shape: f32[2,1,256], index: 0, kind: input, shape index: {}, may-alias: {0,1}]
  %s1 = inlined_call_operand.hbm [shape: f32[2,1,256], index: 1, kind: output, shape index: {}, may-alias: {0,1}]
  %s2 = sld [smem:[#allocation0]]
  $region41: #{tpu_custom_call.1} parent=0
    _
  %s4 = ssub.s32 1, %s2
  %s5 = scalar_select 0, %s4, %s2
  $region1: #{tpu_custom_call.1} parent=0
    #allocation2 [shape = 'u8[2048]{0}', space=vmem, size = 0x800, scoped, tag = 'input window, operand 0']
    #allocation3 [shape = 's32[2]{0}', space=sflag, size = 0x8, scoped, tag = 'scoped memory for tpu_custom_call.1']
    #allocation4 [shape = 's32[2]{0}', space=sflag, size = 0x8, scoped, tag = 'scoped memory for tpu_custom_call.1']
    #allocation5 [shape = 'u8[2048]{0}', space=vmem, size = 0x800, scoped, tag = 'output window, operand 0']
    %6 = vsyncpa [#allocation3], 0
    %s7 = scalar_lea.sflag [#allocation3], 1
    %8 = vsyncpa %s7, 0
    %9 = vsyncpa [#allocation4], 0
    %s10 = scalar_lea.sflag [#allocation4], 1
    %11 = vsyncpa %s10, 0
    loop: start=0, step=1, limit=4
    $region2: #{tpu_custom_call.1} parent=1 // loop_pre_header
      _
    $region3: #{tpu_custom_call.1} parent=1 // loop_header
      %s13 = sphi 0, %s17
      %p14 = scmp.ge.s32.totalorder %s13, 4
      %s20 = sphi 0, %s32
      %s21 = sphi 0, %s28
      %s22 = sphi 0, %s20
      %s23 = sphi 0, %s21
      %s24 = sphi 0, %s22
      %s25 = sphi 0, %s23
      %s37 = sphi 0, %s39
      %s40 = sphi 0, %s37
      %s41 = sphi 0, %s40
      %s57 = sphi 0, %s41
      %s65 = sphi 0, %s67
      %s68 = sphi 0, %s65
      %s69 = sphi 0, %s68
      %s85 = sphi 0, %s69
    $region4: #{tpu_custom_call.1} parent=1 // loop_header_branch
      %16 = sbr.rel (%p14) target = $region8
    $region5: #{tpu_custom_call.1} parent=1 // loop_body
      %s18 = ssub.s32 %s13, 1
      %s19 = ssub.s32 %s13, 2
      %s26 = sadd.s32 1, %s21
      %p27 = scmp.ge.s32.totalorder %s26, 1
      %s28 = scalar_select %p27, 0, %s26
      %s29 = sadd.s32 1, %s20
      %s30 = scalar_select %p27, %s29, %s20
      %p31 = scmp.ge.s32.totalorder %s30, 2
      %s32 = scalar_select %p31, 0, %s30
      %s33 = ssub.s32 %s20, %s32
      %s34 = ssub.s32 %s21, %s28
      %s35 = sor.u32 %s33, %s34
      %p36 = scmp.eq.s32.totalorder %s35, 0
      %s38 = sadd.s32 %s37, 1
      %s39 = scalar_select %p36, %s37, %s38
      %p42 = pneg %p36
      %p43 = scmp.eq.s32.totalorder %s13, 1
      %p44 = por %p42, %p43
      %p45 = scmp.ne.s32.totalorder %s37, %s40
      %p46 = scmp.eq.s32.totalorder %s13, 0
      %p47 = por %p45, %p46
      %p48 = scmp.ne.s32.totalorder %s37, %s40
      %p49 = scmp.eq.s32.totalorder %s18, 1
      %p50 = por %p48, %p49
      %p51 = scmp.ne.s32.totalorder %s40, %s41
      %p52 = scmp.eq.s32.totalorder %s18, 0
      %p53 = por %p51, %p52
      %p54 = scmp.ne.s32.totalorder %s40, %s41
      %p55 = scmp.eq.s32.totalorder %s19, 1
      %p56 = por %p54, %p55
      %p58 = scmp.ne.s32.totalorder %s41, %s57
      %p59 = scmp.eq.s32.totalorder %s19, 0
      %p60 = por %p58, %p59
      %s61 = ssub.s32 %s20, %s32
      %s62 = ssub.s32 %s21, %s28
      %s63 = sor.u32 %s61, %s62
      %p64 = scmp.eq.s32.totalorder %s63, 0
      %s66 = sadd.s32 %s65, 1
      %s67 = scalar_select %p64, %s65, %s66
      %p70 = pneg %p64
      %p71 = scmp.eq.s32.totalorder %s13, 1
      %p72 = por %p70, %p71
      %p73 = scmp.ne.s32.totalorder %s65, %s68
      %p74 = scmp.eq.s32.totalorder %s13, 0
      %p75 = por %p73, %p74
      %p76 = scmp.ne.s32.totalorder %s65, %s68
      %p77 = scmp.eq.s32.totalorder %s18, 1
      %p78 = por %p76, %p77
      %p79 = scmp.ne.s32.totalorder %s68, %s69
      %p80 = scmp.eq.s32.totalorder %s18, 0
      %p81 = por %p79, %p80
      %p82 = scmp.ne.s32.totalorder %s68, %s69
      %p83 = scmp.eq.s32.totalorder %s19, 1
      %p84 = por %p82, %p83
      %p86 = scmp.ne.s32.totalorder %s69, %s85
      %p87 = scmp.eq.s32.totalorder %s19, 0
      %p88 = por %p86, %p87
      %p89 = scmp.le.s32.totalorder 1, %s13
      %p90 = scmp.lt.s32.totalorder %s13, 3
      %p91 = pnand %p89, %p90
      %p92 = pneg %p91
      // Predicated region
      $region9: #{tpu_custom_call.1} parent=5 // pred_check
        _
      $region10: #{tpu_custom_call.1} parent=5 // pred_check_branch
        %94 = sbr.rel (%p91) target = $region12
      $region11: #{tpu_custom_call.1} parent=5 // pred_region
        %s95 = ssub.s32 %s13, 1
      $region12: #{tpu_custom_call.1} parent=5 // pred_fallthru
        _
      %p96 = scmp.lt.s32.totalorder %s13, 2
      // Predicated region
      $region13: #{tpu_custom_call.1} parent=5 // pred_check
        %p97 = pneg %p96
      $region14: #{tpu_custom_call.1} parent=5 // pred_check_branch
        %99 = sbr.rel (%p97) target = $region16
      $region15: #{tpu_custom_call.1} parent=5 // pred_region
        // Predicated region
        $region17: #{tpu_custom_call.1} parent=15 // pred_check
          %p100 = pneg %p47
        $region18: #{tpu_custom_call.1} parent=15 // pred_check_branch
          %102 = sbr.rel (%p100) target = $region20
        $region19: #{tpu_custom_call.1} parent=15 // pred_region
          %s103 = sand.u32 %s37, 1
          %s104 = scalar_lea.sflag [#allocation3], %s103
          %s105 = sand.u32 %s37, 1
          %s106 = smul.addr %s105, 2
          %s107 = scalar_lea.vmem [#allocation2], %s106
          %s109 = ssub.s32 32, 32
          %110 = vsyncadd %s104, %s109
          %s111 = smul.addr %s21, 2
          %s112 = smul.addr %s20, 2
          %s113 = sadd.s32 %s111, %s112
          %s114 = smul.addr %s113, 16
          %s115 = scalar_lea.hbm %s0, %s114
          %s117 = sshll.u32 %s107, 4
          %s118 = int_to_ptr.vmem [resolvable:$true] %s117
          %120 = dma.hbm_to_vmem [thread:$0]  %s115, 32, %s118, %s104
        $region20: #{tpu_custom_call.1} parent=15 // pred_fallthru
          _
      $region16: #{tpu_custom_call.1} parent=5 // pred_fallthru
        _
      %p121 = scmp.le.s32.totalorder 1, %s13
      %p122 = scmp.lt.s32.totalorder %s13, 3
      %p123 = pnand %p121, %p122
      %p124 = pneg %p123
      // Predicated region
      $region21: #{tpu_custom_call.1} parent=5 // pred_check
        _
      $region22: #{tpu_custom_call.1} parent=5 // pred_check_branch
        %126 = sbr.rel (%p123) target = $region24
      $region23: #{tpu_custom_call.1} parent=5 // pred_region
        %s127 = ssub.s32 %s13, 1
        %s128 = sand.u32 %s40, 1
        %s129 = scalar_lea.sflag [#allocation3], %s128
        %s130 = sand.u32 %s40, 1
        %s131 = smul.addr %s130, 2
        %s132 = scalar_lea.vmem [#allocation2], %s131
        // Predicated region
        $region25: #{tpu_custom_call.1} parent=23 // pred_check
          %p133 = pneg %p53
        $region26: #{tpu_custom_call.1} parent=23 // pred_check_branch
          %135 = sbr.rel (%p133) target = $region28
        $region27: #{tpu_custom_call.1} parent=23 // pred_region
          %136 = dma.done %s129, 32
        $region28: #{tpu_custom_call.1} parent=23 // pred_fallthru
          _
        %s137 = sand.u32 %s40, 1
        %s138 = scalar_lea.sflag [#allocation3], %s137
        %s139 = sand.u32 %s40, 1
        %s140 = smul.addr %s139, 2
        %s141 = scalar_lea.vmem [#allocation2], %s140
        %p142 = pneg %p53
        %p143 = pneg %p50
        %p144 = pneg %p81
        %p145 = pneg %p78
        %s146 = sand.u32 %s68, 1
        %s147 = scalar_lea.sflag [#allocation4], %s146
        %s148 = sand.u32 %s68, 1
        %s149 = smul.addr %s148, 2
        %s150 = scalar_lea.vmem [#allocation5], %s149
        %v151 = vlaneseq
        %v152 = vshrl.u32 %v151, 7
        %v153 = vlaneseq
        %v154 = vand.u32 %v153, 127
        %v155 = vadd.s32 %v154, 128
        %v156 = vstv %s23
        %v157 = vadd.s32 %v156, %v152
        %v158 = vmul.u32 %v157, 256
        %v159 = vadd.s32 %v158, %v154
        %v160 = vadd.s32 %v158, %v155
        %v161 = vshra.s32 %v159, 5
        %v162 = vshra.s32 %v160, 5
        %v163 = vcvt.s32.f32 %v161
        %v164 = vcvt.s32.f32 %v162
        %v165 = vand.u32 %v159, 1
        %v166 = vand.u32 %v160, 1
        %vm167 = vcmp.eq.s32.totalorder %v165, 0
        %vm168 = vcmp.eq.s32.totalorder %v166, 0
        %v169 = vsel %vm167, %v163, 0.0
        %v170 = vsel %vm168, %v164, 0.0
        %v171 = vld [vmem:[%s132] sm:$0x3]
        %v172 = vmul.f32 %v171, 0.5
        %v175 = vcombine.low %v169, %v170
        %v177 = vunpack.c.l.s4 1966171168
        %v178 = vunpack.c.0.s8 %v177
        %v179 = vlaneseq
        %v180 = vshrl.u32 %v179, 7
        %v181 = vsub.s32 %v178, %v180
        %v182 = vrot.slane %v175, %v181
        %v184 = vunpack.c.l.s4 1966171168
        %v185 = vunpack.c.0.s8 %v184
        %v186 = vlaneseq
        %v187 = vshrl.u32 %v186, 7
        %v188 = vsub.s32 %v185, %v187
        %v189 = vrot.slane %v182, %v188
        %v191 = vadd.f32 %v172, %v189
        %v192 = vlaneseq
        %vm193 = vcmp.ge.s32.totalorder %v192, 0
        %vm194 = vcmp.lt.s32.totalorder %v192, 256
        %vm195 = vmand %vm193, %vm194
        %196 = vst.msk [vmem:[%s150] sm:$0x3] %vm195, %v191
        %s197 = sand.u32 %s68, 1
        %s198 = scalar_lea.sflag [#allocation4], %s197
        %s199 = sand.u32 %s68, 1
        %s200 = smul.addr %s199, 2
        %s201 = scalar_lea.vmem [#allocation5], %s200
        // Predicated region
        $region29: #{tpu_custom_call.1} parent=23 // pred_check
          %p202 = pneg %p78
        $region30: #{tpu_custom_call.1} parent=23 // pred_check_branch
          %204 = sbr.rel (%p202) target = $region32
        $region31: #{tpu_custom_call.1} parent=23 // pred_region
          %s206 = ssub.s32 32, 32
          %207 = vsyncadd %s198, %s206
          %s208 = smul.addr %s23, 2
          %s209 = smul.addr %s22, 2
          %s210 = sadd.s32 %s208, %s209
          %s211 = smul.addr %s210, 16
          %s212 = scalar_lea.hbm %s1, %s211
          %s214 = sshll.u32 %s201, 4
          %s215 = int_to_ptr.vmem [resolvable:$true] %s214
          %217 = dma.vmem_to_hbm [thread:$0]  %s215, 32, %s212, %s198
        $region32: #{tpu_custom_call.1} parent=23 // pred_fallthru
          _
      $region24: #{tpu_custom_call.1} parent=5 // pred_fallthru
        _
      %p218 = scmp.le.s32.totalorder 2, %s13
      // Predicated region
      $region33: #{tpu_custom_call.1} parent=5 // pred_check
        %p219 = pneg %p218
      $region34: #{tpu_custom_call.1} parent=5 // pred_check_branch
        %221 = sbr.rel (%p219) target = $region36
      $region35: #{tpu_custom_call.1} parent=5 // pred_region
        %s222 = ssub.s32 %s13, 2
        // Predicated region
        $region37: #{tpu_custom_call.1} parent=35 // pred_check
          %p223 = pneg %p84
        $region38: #{tpu_custom_call.1} parent=35 // pred_check_branch
          %225 = sbr.rel (%p223) target = $region40
        $region39: #{tpu_custom_call.1} parent=35 // pred_region
          %s226 = sand.u32 %s69, 1
          %s227 = scalar_lea.sflag [#allocation4], %s226
          %s228 = sand.u32 %s69, 1
          %s229 = smul.addr %s228, 2
          %s230 = scalar_lea.vmem [#allocation5], %s229
          %231 = dma.done %s227, 32
        $region40: #{tpu_custom_call.1} parent=35 // pred_fallthru
          _
      $region36: #{tpu_custom_call.1} parent=5 // pred_fallthru
        _
    $region6: #{tpu_custom_call.1} parent=1 // loop_footer
      %s17 = sadd.s32 1, %s13
    $region7: #{tpu_custom_call.1} parent=1 // loop_footer_branch
      %12 = sbr.rel target = $region3
    $region8: #{tpu_custom_call.1} parent=1 // loop_exit
      _
    %232 = vsyncpa [#allocation3], 1
    %s233 = scalar_lea.sflag [#allocation3], 1
    %234 = vsyncpa %s233, 1
    %235 = vsyncpa [#allocation4], 1
    %s236 = scalar_lea.sflag [#allocation4], 1
    %237 = vsyncpa %s236, 1

</llo_original>
